<compile_context>
chip_gen: v5e
topology: v5e:2x2
jax: 0.10.0
libtpu: 0.0.40
codegen_flags: <defaults>
</compile_context>

<pallas_src>
import math
import functools

import jax
import jax.numpy as jnp
from jax.experimental import pallas as pl
from jax.experimental.pallas import tpu as pltpu


def _round_up(x, m):
    return ((x + m - 1) // m) * m


def _siren_kernel(x_ref, wt_ref, b_ref, o_ref, *, mxu_dtype):
    # x_ref : (TM, K)   VMEM
    # wt_ref: (K, TN)   VMEM  (pre-transposed, w0 pre-folded)
    # b_ref : (1, TN)   VMEM  (w0 pre-folded)
    # o_ref : (TM, TN)  VMEM
    x = x_ref[...]
    w = wt_ref[...]
    if mxu_dtype is not None:
        # In-kernel cast: keeps a single HBM pass over x (no wrapper-side cast).
        x = x.astype(mxu_dtype)
        w = w.astype(mxu_dtype)
    acc = jnp.dot(x, w, preferred_element_type=jnp.float32)
    # Keep the bias add + sin strictly in f32; only cast at the store.
    o_ref[...] = jnp.sin(acc + b_ref[...].astype(jnp.float32)).astype(o_ref.dtype)


def prepare_siren_params(weight, bias, w0=1.0):
    """One-time prep (do this at init, not per forward).

    weight: (dim_out, dim_in) PyTorch nn.Linear layout
    bias:   (dim_out,) or None
    Returns (wt, b) with w0 folded in:
      wt = (w0 * weight).T  -> (dim_in, dim_out)
      b  = w0 * bias        -> (dim_out,)
    """
    dim_out = weight.shape[0]
    wt = (w0 * weight).T
    if bias is None:
        b = jnp.zeros((dim_out,), dtype=weight.dtype)
    else:
        b = w0 * bias
    return wt, b


def siren_forward(x, wt, b_scaled, *, tm=None, tn=None, use_bf16_mxu=False,
                  out_dtype=None):
    """Pallas Siren forward.

    x:        (N, dim_in)       activations
    wt:       (dim_in, dim_out) pre-transposed, w0-folded weight
    b_scaled: (dim_out,)        w0-folded bias
    """
    n, dim_in = x.shape
    k_w, dim_out = wt.shape
    assert dim_in == k_w, "x / weight dim_in mismatch"
    out_dtype = jnp.dtype(out_dtype) if out_dtype is not None else jnp.dtype(x.dtype)

    # ---- N tiling: full-width output block whenever it reasonably fits so the
    # weight / bias block index never changes -> fetched once, VMEM-resident.
    if tn is None:
        tn = dim_out if dim_out <= 2048 else 512
    tn = min(tn, dim_out)
    if tn < dim_out:
        tn = max(128, (tn // 128) * 128)  # partial-width tiles must be lane-aligned

    x_item = jnp.dtype(x.dtype).itemsize
    w_item = jnp.dtype(wt.dtype).itemsize
    o_item = out_dtype.itemsize
    # Weight VMEM footprint: resident (1 buffer) when single N block, else 2x.
    wt_bytes = dim_in * tn * w_item * (1 if tn == dim_out else 2)

    # ---- M tiling: big tiles to amortize the ~0.35us/step pipeline overhead,
    # clamped to a conservative VMEM budget (double-buffered x/out + weights).
    if tm is None:
        budget = 24 * 1024 * 1024
        tm = 1024
        while tm > 64 and wt_bytes + 2 * tm * (dim_in * x_item + tn * o_item) > budget:
            tm //= 2
        if n <= tm:
            if n >= 512:
                # Split in two so both v7x TensorCores get a row block.
                tm = _round_up(-(-n // 2), 8)
            else:
                tm = n  # single full-extent block (always layout-legal)
    if tm != n and tm % 8 != 0:
        tm = _round_up(tm, 8)
    if tm != n:
        tm = min(tm, _round_up(n, 8))

    grid = (pl.cdiv(n, tm), pl.cdiv(dim_out, tn))

    # vmem limit sized to the actual working set (never the full physical VMEM).
    est = (wt_bytes + 2 * tn * 4
           + 2 * tm * dim_in * x_item
           + 2 * tm * tn * o_item
           + (2 << 20))
    vmem_limit = int(min(max(est, 16 << 20), 32 << 20))

    mxu_dtype = jnp.bfloat16 if use_bf16_mxu else None
    b2d = b_scaled.reshape(1, dim_out)

    out = pl.pallas_call(
        functools.partial(_siren_kernel, mxu_dtype=mxu_dtype),
        out_shape=jax.ShapeDtypeStruct((n, dim_out), out_dtype),
        grid_spec=pltpu.PrefetchScalarGridSpec(
            num_scalar_prefetch=0,
            grid=grid,
            in_specs=[
                # activations: stream over the M axis, full K extent
                pl.BlockSpec((tm, dim_in), lambda i, j: (i, 0)),
                # weights: block index constant along M -> resident when
                # dim_out fits in one TN tile (the typical SIREN case)
                pl.BlockSpec((dim_in, tn), lambda i, j: (0, j)),
                # bias
                pl.BlockSpec((1, tn), lambda i, j: (0, j)),
            ],
            out_specs=pl.BlockSpec((tm, tn), lambda i, j: (i, j)),
        ),
        compiler_params=pltpu.CompilerParams(
            dimension_semantics=("parallel", "parallel"),
            vmem_limit_bytes=vmem_limit,
        ),
    )(x, wt, b2d)

    return out


def make_siren_params(key, dim_in, dim_out, w0=1.0, c=6.0, is_first=False):
    """Deterministic uniform(-w_std, w_std) init matching Siren.init_."""
    w_std = (1.0 / dim_in) if is_first else (math.sqrt(c / dim_in) / w0)
    kw, kb = jax.random.split(key)
    weight = jax.random.uniform(
        kw, (dim_out, dim_in), dtype=jnp.float32, minval=-w_std, maxval=w_std)
    bias = jax.random.uniform(
        kb, (dim_out,), dtype=jnp.float32, minval=-w_std, maxval=w_std)
    return weight, bias


def _reference(x, weight, bias, w0):
    y = jnp.dot(x, weight.T, precision=jax.lax.Precision.HIGHEST) + bias
    return jnp.sin(w0 * y)


if __name__ == "__main__":
    key = jax.random.PRNGKey(0)

    # --- check 1: small shapes matching the module defaults ----------------
    batch, dim_in, dim_out, w0 = 8, 32, 32, 1.0
    k1, k2, key = jax.random.split(key, 3)
    x = jax.random.normal(k1, (batch, dim_in), dtype=jnp.float32)
    weight, bias = make_siren_params(k2, dim_in, dim_out, w0=w0, is_first=False)

    wt, b_s = prepare_siren_params(weight, bias, w0=w0)
    out = jax.block_until_ready(siren_forward(x, wt, b_s))
    ref = _reference(x, weight, bias, w0)
    assert out.shape == (batch, dim_out)
    assert jnp.allclose(out, ref, atol=1e-5, rtol=1e-5), "mismatch (check 1)"

    # --- check 2: uneven shapes, forced small tiles -> ragged M and N blocks
    batch2, dim_in2, dim_out2, w02 = 300, 48, 160, 30.0
    k3, k4, key = jax.random.split(key, 3)
    x2 = jax.random.normal(k3, (batch2, dim_in2), dtype=jnp.float32)
    weight2, bias2 = make_siren_params(k4, dim_in2, dim_out2, w0=w02, is_first=True)

    wt2, b_s2 = prepare_siren_params(weight2, bias2, w0=w02)
    out2 = jax.block_until_ready(siren_forward(x2, wt2, b_s2, tm=128, tn=128))
    ref2 = _reference(x2, weight2, bias2, w02)
    assert out2.shape == (batch2, dim_out2)
    assert jnp.allclose(out2, ref2, atol=1e-4, rtol=1e-4), "mismatch (check 2)"

    # --- check 3: default big-TM path, multiple M blocks, resident weights ---
    batch3, dim_in3, dim_out3, w03 = 2048, 64, 256, 1.0
    k5, k6, key = jax.random.split(key, 3)
    x3 = jax.random.normal(k5, (batch3, dim_in3), dtype=jnp.float32)
    weight3, bias3 = make_siren_params(k6, dim_in3, dim_out3, w0=w03, is_first=False)

    wt3, b_s3 = prepare_siren_params(weight3, bias3, w0=w03)
    out3 = jax.block_until_ready(siren_forward(x3, wt3, b_s3))
    ref3 = _reference(x3, weight3, bias3, w03)
    assert out3.shape == (batch3, dim_out3)
    assert jnp.allclose(out3, ref3, atol=1e-4, rtol=1e-4), "mismatch (check 3)"

    # --- check 4: in-kernel bf16 MXU path (loose tolerance: bf16 operands) ---
    out4 = jax.block_until_ready(siren_forward(x, wt, b_s, use_bf16_mxu=True))
    assert out4.shape == (batch, dim_out)
    assert jnp.allclose(out4, ref, atol=0.1, rtol=0.1), "mismatch (check 4, bf16)"

    print("KERNEL_OK")
</pallas_src>

<mosaic_0001>
module attributes {stable_mosaic.version = 11 : i64} {
  func.func @_siren_kernel(%arg0: i32, %arg1: i32, %arg2: memref<8x32xf32, #tpu.memory_space<vmem>>, %arg3: memref<32x32xf32, #tpu.memory_space<vmem>>, %arg4: memref<1x32xf32, #tpu.memory_space<vmem>>, %arg5: memref<8x32xf32, #tpu.memory_space<vmem>>) attributes {dimension_semantics = [#tpu.dimension_semantics<parallel>, #tpu.dimension_semantics<parallel>], iteration_bounds = array<i64: 1, 1>, scalar_prefetch = 0 : i64, scratch_operands = 0 : i64, tpu.core_type = #tpu.core_type<tc>, window_params = [{transform_indices = @transform_0, window_bounds = array<i64: 8, 32>}, {transform_indices = @transform_1, window_bounds = array<i64: 32, 32>}, {transform_indices = @transform_2, window_bounds = array<i64: 1, 32>}, {transform_indices = @transform_3, window_bounds = array<i64: 8, 32>}]} {
    %c0 = arith.constant 0 : index
    %c0_0 = arith.constant 0 : index
    %0 = vector.load %arg2[%c0, %c0_0] : memref<8x32xf32, #tpu.memory_space<vmem>>, vector<8x32xf32>
    %c0_1 = arith.constant 0 : index
    %c0_2 = arith.constant 0 : index
    %1 = vector.load %arg3[%c0_1, %c0_2] : memref<32x32xf32, #tpu.memory_space<vmem>>, vector<32x32xf32>
    %cst = arith.constant dense<0.000000e+00> : vector<8x32xf32>
    %2 = tpu.matmul %0, %1, %cst {dimension_numbers = #tpu.dot_dimension_numbers<[1], [0], [0], [1], [0, 0, 1, 1], [], []>} : vector<8x32xf32>, vector<32x32xf32>, vector<8x32xf32> -> vector<8x32xf32>
    %c0_3 = arith.constant 0 : index
    %c0_4 = arith.constant 0 : index
    %3 = vector.load %arg4[%c0_3, %c0_4] : memref<1x32xf32, #tpu.memory_space<vmem>>, vector<1x32xf32>
    %4 = vector.broadcast %3 : vector<1x32xf32> to vector<8x32xf32>
    %5 = arith.addf %2, %4 : vector<8x32xf32>
    %6 = math.sin %5 : vector<8x32xf32>
    %c0_5 = arith.constant 0 : index
    %c0_6 = arith.constant 0 : index
    %7 = vector.load %arg5[%c0_5, %c0_6] : memref<8x32xf32, #tpu.memory_space<vmem>>, vector<8x32xf32>
    tpu.vector_store %arg5[%c0_5, %c0_6], %6 {strides = array<i32>} : memref<8x32xf32, #tpu.memory_space<vmem>>, vector<8x32xf32>,
    return
  }
  func.func @transform_0(%arg0: i32, %arg1: i32) -> (i32, i32) {
    %c0_i32 = arith.constant 0 : i32
    %c0_i32_0 = arith.constant 0 : i32
    return %arg0, %c0_i32 : i32, i32
  }
  func.func @transform_1(%arg0: i32, %arg1: i32) -> (i32, i32) {
    %c0_i32 = arith.constant 0 : i32
    %c0_i32_0 = arith.constant 0 : i32
    return %c0_i32, %arg1 : i32, i32
  }
  func.func @transform_2(%arg0: i32, %arg1: i32) -> (i32, i32) {
    %c0_i32 = arith.constant 0 : i32
    %c0_i32_0 = arith.constant 0 : i32
    return %c0_i32, %arg1 : i32, i32
  }
  func.func @transform_3(%arg0: i32, %arg1: i32) -> (i32, i32) {
    %c0_i32 = arith.constant 0 : i32
    return %arg0, %arg1 : i32, i32
  }
}

</mosaic_0001>

<llo_original>
// kernel: tpu_custom_call.1
$region0: #{tpu_custom_call.1}
  #allocation0 [shape = 'u32[]', space=smem, size = 0x4, offset = 0x4, fixed_abs, tag = 'smem constant byte address 0x4 - core index']
  #allocation1 [shape = 'u32[72,128]{1,0:T(1,128)}', space=vmem, size = 0x9000, scoped, tag = 'internal scratch']
  %s0 = inlined_call_operand.hbm [shape: f32[8,32], index: 0, kind: input, shape index: {}]
  %s1 = inlined_call_operand.hbm [shape: f32[32,32], index: 1, kind: input, shape index: {}]
  %s2 = inlined_call_operand.vmem [shape: f32[1,32], index: 2, kind: input, shape index: {}]
  %s3 = inlined_call_operand.hbm [shape: f32[8,32], index: 3, kind: output, shape index: {}]
  %s4 = sld [smem:[#allocation0]]
  $region30: #{tpu_custom_call.1} parent=0
    _
  %s6 = ssub.s32 1, %s4
  %s7 = scalar_select 0, %s6, %s4
  $region1: #{tpu_custom_call.1} parent=0
    #allocation2 [shape = 'u8[4096]{0}', space=vmem, size = 0x1000, scoped, tag = 'input window, operand 0, single buffered']
    #allocation3 [shape = 's32[1]{0}', space=sflag, size = 0x4, scoped, tag = 'scoped memory for tpu_custom_call.1']
    #allocation4 [shape = 's32[1]{0}', space=sflag, size = 0x4, scoped, tag = 'scoped memory for tpu_custom_call.1']
    #allocation5 [shape = 'u8[16384]{0}', space=vmem, size = 0x4000, scoped, tag = 'input window, operand 1, single buffered']
    #allocation6 [shape = 's32[1]{0}', space=sflag, size = 0x4, scoped, tag = 'scoped memory for tpu_custom_call.1']
    #allocation7 [shape = 'u8[4096]{0}', space=vmem, size = 0x1000, scoped, tag = 'output window, operand 0, single buffered']
    %8 = vsyncpa [#allocation3], 0
    %9 = vsyncpa [#allocation6], 0
    %10 = vsyncpa [#allocation4], 0
    // Predicated region
    $region2: #{tpu_custom_call.1} parent=1 // pred_check
      _
    $region3: #{tpu_custom_call.1} parent=1 // pred_check_branch
      %12 = sbr.rel (0) target = $region5
    $region4: #{tpu_custom_call.1} parent=1 // pred_region
      %14 = vsyncadd [#allocation3], 0
      %s16 = sshll.u32 %s0, 4
      %s17 = int_to_ptr.hbm [resolvable:$true] %s16
      %s18 = sshll.u32 [#allocation2], 4
      %s19 = int_to_ptr.vmem [resolvable:$true] %s18
      %21 = dma.hbm_to_vmem [thread:$0]  %s17, 128, %s19, [#allocation3]
    $region5: #{tpu_custom_call.1} parent=1 // pred_fallthru
      _
    // Predicated region
    $region6: #{tpu_custom_call.1} parent=1 // pred_check
      _
    $region7: #{tpu_custom_call.1} parent=1 // pred_check_branch
      %23 = sbr.rel (0) target = $region9
    $region8: #{tpu_custom_call.1} parent=1 // pred_region
      %25 = vsyncadd [#allocation6], 0
      %s26 = sshll.u32 %s1, 4
      %s27 = int_to_ptr.hbm [resolvable:$true] %s26
      %s28 = sshll.u32 [#allocation5], 4
      %s29 = int_to_ptr.vmem [resolvable:$true] %s28
      %34 = dma.hbm_to_vmem [thread:$0]  %s27, 512, %s29, [#allocation6], 128, 128, 8
    $region9: #{tpu_custom_call.1} parent=1 // pred_fallthru
      _
    // Predicated region
    $region10: #{tpu_custom_call.1} parent=1 // pred_check
      _
    $region11: #{tpu_custom_call.1} parent=1 // pred_check_branch
      %36 = sbr.rel (0) target = $region13
    $region12: #{tpu_custom_call.1} parent=1 // pred_region
      _
    $region13: #{tpu_custom_call.1} parent=1 // pred_fallthru
      _
    // Predicated region
    $region14: #{tpu_custom_call.1} parent=1 // pred_check
      _
    $region15: #{tpu_custom_call.1} parent=1 // pred_check_branch
      %38 = sbr.rel (0) target = $region17
    $region16: #{tpu_custom_call.1} parent=1 // pred_region
      %40 = dma.done [#allocation3], 128
    $region17: #{tpu_custom_call.1} parent=1 // pred_fallthru
      _
    // Predicated region
    $region18: #{tpu_custom_call.1} parent=1 // pred_check
      _
    $region19: #{tpu_custom_call.1} parent=1 // pred_check_branch
      %42 = sbr.rel (0) target = $region21
    $region20: #{tpu_custom_call.1} parent=1 // pred_region
      %44 = dma.done [#allocation6], 512
    $region21: #{tpu_custom_call.1} parent=1 // pred_fallthru
      _
    %v45 = vld [vmem:[#allocation2] sm:$0xff]
    %v46 = vld [vmem:[#allocation5] sm:$0xff]
    %v47 = vld [vmem:[#allocation5 + $0x8] sm:$0xff]
    %v48 = vld [vmem:[#allocation5 + $0x10] sm:$0xff]
    %v49 = vld [vmem:[#allocation5 + $0x18] sm:$0xff]
    %v50 = vld [vmem:[%s2] sm:$0x1]
    %v52 = vperm.slane %v50, 0
    %vm54 = vcmask 261120
    %v56 = vsel %vm54, %v45, 0
    %58 = vmatpush.msra.mxu0 0.0
    %59 = vmatpush.msra.mxu0 0.0
    %60 = vmatpush.msra.mxu0 0.0
    %61 = vmatpush.msra.mxu0 0.0
    %62 = vmatpush.msra.mxu0 0.0
    %63 = vmatpush.msra.mxu0 0.0
    %64 = vmatpush.msra.mxu0 0.0
    %65 = vmatpush.msra.mxu0 0.0
    %66 = vmatpush.msra.mxu0 0.0
    %67 = vmatpush.msra.mxu0 0.0
    %68 = vmatpush.msra.mxu0 0.0
    %69 = vmatpush.msra.mxu0 0.0
    %70 = vmatpush.msra.mxu0 %v49
    %71 = vmatpush.msra.mxu0 %v48
    %72 = vmatpush.msra.mxu0 %v47
    %73 = vmatpush.msra.mxu0 %v46
    %74 = vmatmul.f32.gmra.mxu0 %v56
    %v75 = vpop.f32.mrf.mxu0
    %v76 = vadd.f32 %v52, %v75
    %77 = vdwg.mxu0
    %v78 = vand.u32 2147483647, %v76
    %vm79 = vcmp.le.f32.partialorder %v78, 0.7853982
    %vm80 = vcmp.lt.s32.totalorder %v76, 0
    %v81 = vand.u32 %v76, 2139095040
    %v82 = vshrl.u32 %v81, 23
    %v83 = vsub.s32 %v82, 127
    %v84 = vand.u32 2147483647, %v76
    %v85 = vand.u32 %v84, 8388607
    %v86 = vor.u32 %v85, 8388608
    %v87 = vsub.s32 0, %v86
    %v88 = vadd.s32 %v83, 1
    %vm89 = vcmp.gt.s32.totalorder %v88, 0
    %v90 = vsel %vm89, %v88, 0
    %v91 = vshrl.u32 %v90, 5
    %v92 = vand.u32 %v90, 31
    %v93 = vsub.s32 32, %v92
    %v94 = vshrl.u32 683565275, %v93
    %v95 = vshll.u32 683565275, %v92
    %v96 = vshrl.u32 2475754826, %v93
    %v97 = vor.u32 %v95, %v96
    %v98 = vshll.u32 2475754826, %v92
    %v99 = vshrl.u32 2131351028, %v93
    %v100 = vor.u32 %v98, %v99
    %v101 = vshll.u32 2131351028, %v92
    %v102 = vshrl.u32 2102212464, %v93
    %v103 = vor.u32 %v101, %v102
    %v104 = vshll.u32 2102212464, %v92
    %v105 = vshrl.u32 920167782, %v93
    %v106 = vor.u32 %v104, %v105
    %v107 = vshll.u32 920167782, %v92
    %v108 = vshrl.u32 1326507024, %v93
    %v109 = vor.u32 %v107, %v108
    %vm110 = vcmp.lt.s32.totalorder %v91, 1
    %vm111 = vcmp.lt.s32.totalorder %v91, 2
    %vm112 = vcmp.lt.s32.totalorder %v91, 3
    %vm113 = vcmp.lt.s32.totalorder %v91, 4
    %v114 = vsel %vm110, %v94, %v97
    %v115 = vsel %vm113, %v103, 2102212464
    %v116 = vsel %vm112, %v100, %v115
    %v117 = vsel %vm111, %v114, %v116
    %v118 = vsel %vm110, %v97, %v100
    %v119 = vsel %vm113, %v106, 920167782
    %v120 = vsel %vm112, %v103, %v119
    %v121 = vsel %vm111, %v118, %v120
    %v122 = vsel %vm110, %v100, %v103
    %v123 = vsel %vm113, %v109, 1326507024
    %v124 = vsel %vm112, %v106, %v123
    %v125 = vsel %vm111, %v122, %v124
    %v126 = vshll.u32 %v86, 8
    %v127 = vand.u32 %v126, 65535
    %v128 = vshrl.u32 %v126, 16
    %v129 = vand.u32 %v125, 65535
    %v130 = vshrl.u32 %v125, 16
    %v131 = vmul.u32 %v127, %v129
    %v132 = vmul.u32 %v127, %v130
    %v133 = vmul.u32 %v128, %v129
    %v134 = vmul.u32 %v128, %v130
    %v135 = vshll.u32 %v132, 16
    %v136 = vshrl.u32 %v132, 16
    %v137 = vshll.u32 %v133, 16
    %v138 = vshrl.u32 %v133, 16
    %vm139 = vc.u32 %v131, %v135
    %v140 = vsel %vm139, 1, 0
    %v141 = vadd.s32 %v131, %v135
    %v142 = vadd.s32 %v134, %v140
    %vm143 = vc.u32 %v141, %v137
    %v144 = vsel %vm143, 1, 0
    %v145 = vadd.s32 %v141, %v137
    %v146 = vadd.s32 %v142, %v144
    %v147 = vadd.s32 %v146, %v136
    %v148 = vadd.s32 %v147, %v138
    %v149 = vand.u32 %v126, 65535
    %v150 = vshrl.u32 %v126, 16
    %v151 = vand.u32 %v121, 65535
    %v152 = vshrl.u32 %v121, 16
    %v153 = vmul.u32 %v149, %v151
    %v154 = vmul.u32 %v149, %v152
    %v155 = vmul.u32 %v150, %v151
    %v156 = vmul.u32 %v150, %v152
    %v157 = vshll.u32 %v154, 16
    %v158 = vshrl.u32 %v154, 16
    %v159 = vshll.u32 %v155, 16
    %v160 = vshrl.u32 %v155, 16
    %vm161 = vc.u32 %v153, %v157
    %v162 = vsel %vm161, 1, 0
    %v163 = vadd.s32 %v153, %v157
    %v164 = vadd.s32 %v156, %v162
    %vm165 = vc.u32 %v163, %v159
    %v166 = vsel %vm165, 1, 0
    %v167 = vadd.s32 %v163, %v159
    %v168 = vadd.s32 %v164, %v166
    %v169 = vadd.s32 %v168, %v158
    %v170 = vadd.s32 %v169, %v160
    %v171 = vmul.u32 %v126, %v117
    %v172 = vadd.s32 %v148, %v167
    %vm173 = vc.u32 %v148, %v167
    %v174 = vadd.s32 %v170, 1
    %v175 = vsel %vm173, %v174, %v170
    %v176 = vadd.s32 %v171, %v175
    %v177 = vadd.s32 %v176, 536870912
    %v178 = vshrl.u32 %v177, 30
    %v179 = vshll.u32 %v178, 30
    %v180 = vsub.s32 %v176, %v179
    %vm181 = vcmp.lt.s32.totalorder %v180, 0
    %v182 = vsub.s32 0, %v180
    %v183 = vsel %vm181, %v182, %v180
    %v184 = vclz %v183
    %v185 = vsub.s32 %v184, 2
    %vm186 = vcmp.gt.s32.totalorder 0, %v185
    %v187 = vsel %vm186, 0, %v185
    %v188 = vsub.s32 32, %v187
    %v189 = vshll.u32 %v180, %v187
    %v190 = vshrl.u32 %v172, %v188
    %v191 = vor.u32 %v189, %v190
    %v192 = vsub.s32 4294967266, %v187
    %v193 = vadd.s32 %v192, 127
    %v194 = vshll.u32 %v193, 23
    %v195 = vor.u32 4788187, %v194
    %v196 = vand.u32 2147483647, %v195
    %v198 = vcvt.s32.f32 %v191
    %v199 = vmul.f32 %v198, %v196
    %v200 = vxor.u32 %v199, 2147483648
    %v201 = vsel %vm80, %v200, %v199
    %v202 = vsub.s32 4, %v178
    %v203 = vsel %vm80, %v202, %v178
    %v204 = vsel %vm79, %v76, %v201
    %v205 = vsel %vm79, 0, %v203
    %v206 = vmul.f32 %v204, %v204
    %v207 = vmul.f32 %v206, -0.001358992
    %v208 = vadd.f32 %v207, 0.041655596
    %v209 = vmul.f32 %v206, %v208
    %v210 = vadd.f32 %v209, -0.4999988
    %v211 = vmul.f32 %v206, %v210
    %v212 = vadd.f32 1.0, %v211
    %v213 = vmul.f32 %v204, %v204
    %v214 = vmul.f32 %v213, -0.00019511016
    %v215 = vadd.f32 %v214, 0.008332121
    %v216 = vmul.f32 %v213, %v215
    %v217 = vadd.f32 %v216, -0.16666654
    %v218 = vmul.f32 %v213, %v217
    %v219 = vadd.f32 %v218, 1.0
    %v220 = vmul.f32 %v219, %v204
    %vm221 = vweird.f32 %v76
    %v222 = vadd.s32 %v205, 3
    %v223 = vand.u32 %v222, 3
    %vm224 = vcmp.lt.s32.totalorder %v223, 2
    %vm225 = vcmp.eq.s32.totalorder %v223, 0
    %v226 = vxor.u32 %v220, 2147483648
    %v227 = vsel %vm225, %v212, %v226
    %vm228 = vcmp.eq.s32.totalorder %v223, 2
    %v229 = vxor.u32 %v212, 2147483648
    %v230 = vsel %vm228, %v229, %v220
    %v231 = vsel %vm224, %v227, %v230
    %v232 = vsel %vm221, nan, %v231
    %233 = vst.msk [vmem:[#allocation7] sm:$0xff] %vm54, %v232
    // Predicated region
    $region22: #{tpu_custom_call.1} parent=1 // pred_check
      _
    $region23: #{tpu_custom_call.1} parent=1 // pred_check_branch
      %235 = sbr.rel (0) target = $region25
    $region24: #{tpu_custom_call.1} parent=1 // pred_region
      %237 = vsyncadd [#allocation4], 0
      %s239 = sshll.u32 [#allocation7], 4
      %s240 = int_to_ptr.vmem [resolvable:$true] %s239
      %s241 = sshll.u32 %s3, 4
      %s242 = int_to_ptr.hbm [resolvable:$true] %s241
      %244 = dma.vmem_to_hbm [thread:$0]  %s240, 128, %s242, [#allocation4]
    $region25: #{tpu_custom_call.1} parent=1 // pred_fallthru
      _
    // Predicated region
    $region26: #{tpu_custom_call.1} parent=1 // pred_check
      _
    $region27: #{tpu_custom_call.1} parent=1 // pred_check_branch
      %246 = sbr.rel (0) target = $region29
    $region28: #{tpu_custom_call.1} parent=1 // pred_region
      %248 = dma.done [#allocation4], 128
    $region29: #{tpu_custom_call.1} parent=1 // pred_fallthru
      _
    %249 = vsyncpa [#allocation3], 1
    %250 = vsyncpa [#allocation6], 1
    %251 = vsyncpa [#allocation4], 1

</llo_original>
